<compile_context>
chip_gen: v7x
topology: tpu7x:2x2x1
jax: 0.10.0
libtpu: 0.0.40
codegen_flags: <defaults>
</compile_context>

<pallas_src>
import jax
import jax.numpy as jnp
from jax.experimental import pallas as pl
from jax.experimental.pallas import tpu as pltpu


def _div_kernel(scale_ref, x_ref, o_ref):
    # scale_ref: SMEM (1, 1) scalar; x_ref/o_ref: VMEM tiles.
    # Scalar reciprocal once, then a single VPU multiply per vreg.
    inv = 1.0 / scale_ref[0, 0]
    o_ref[...] = x_ref[...] * inv


def div_module(x: jax.Array, scale) -> jax.Array:
    """Elementwise x / scale (scale is a scalar), matching torch semantics."""
    orig_shape = x.shape
    orig_dtype = x.dtype
    itemsize = jnp.dtype(orig_dtype).itemsize

    # Minimum sublane count for the packed layout of this dtype
    # (f32 -> 8, bf16 -> 16, int8/fp8 -> 32).
    sublane_min = max(8, 32 // itemsize)

    flat = x.reshape(-1)
    n = flat.shape[0]

    # Only pad when the flat size is not lane-aligned (avoids extra full-array
    # HBM read+write passes for the common, aligned case).
    base_lane = 128
    n_pad = ((n + base_lane - 1) // base_lane) * base_lane
    padded = n_pad != n
    if padded:
        flat = jnp.pad(flat, (0, n_pad - n))

    # Pick the widest lane (multiple of 128) that divides n_pad, preferring a
    # choice that still leaves at least one full sublane tile of rows.
    lane = base_lane
    for c in (8192, 4096, 2048, 1024, 512, 256, 128):
        if n_pad % c == 0 and (n_pad // c) >= sublane_min:
            lane = c
            break
    else:
        for c in (8192, 4096, 2048, 1024, 512, 256, 128):
            if n_pad % c == 0:
                lane = c
                break

    rows = n_pad // lane
    x2d = flat.reshape(rows, lane)

    # Target ~4 MiB per block: double-buffered in + out => ~16 MiB VMEM,
    # safe on v5e/v6e (128 MiB) and v7x (64 MiB) with a 32 MiB scoped limit.
    target_bytes = 4 * 1024 * 1024
    target_rows = max(
        sublane_min,
        (target_bytes // (lane * itemsize)) // sublane_min * sublane_min,
    )
    if rows <= target_rows:
        # Single block covering the full row extent (full-dim block is legal
        # even when rows is not a multiple of the sublane tile).
        block_rows = rows
    else:
        block_rows = target_rows

    # cdiv grid: Pallas masks the ragged last block, no block_rows halving.
    grid = (pl.cdiv(rows, block_rows),)

    scale_arr = jnp.asarray(scale, dtype=x2d.dtype).reshape(1, 1)

    out2d = pl.pallas_call(
        _div_kernel,
        out_shape=jax.ShapeDtypeStruct((rows, lane), x2d.dtype),
        grid_spec=pltpu.PrefetchScalarGridSpec(
            num_scalar_prefetch=0,
            grid=grid,
            in_specs=[
                pl.BlockSpec(memory_space=pltpu.SMEM),                # scale scalar
                pl.BlockSpec((block_rows, lane), lambda i: (i, 0)),   # x tile
            ],
            out_specs=pl.BlockSpec((block_rows, lane), lambda i: (i, 0)),
        ),
        compiler_params=pltpu.CompilerParams(
            dimension_semantics=("parallel",),
            vmem_limit_bytes=32 << 20,
        ),
        cost_estimate=pl.CostEstimate(
            flops=n_pad,
            transcendentals=0,
            bytes_accessed=2 * n_pad * itemsize,
        ),
    )(scale_arr, x2d)

    out_flat = out2d.reshape(-1)
    if padded:
        out_flat = out_flat[:n]
    return out_flat.reshape(orig_shape).astype(orig_dtype)


if __name__ == "__main__":
    key = jax.random.PRNGKey(0)
    (kx,) = jax.random.split(key, 1)

    # Small NCHW input consistent with the module's forward.
    x = jax.random.normal(kx, (2, 4, 16, 16), dtype=jnp.float32)
    scale = jnp.float32(0.37)

    out = div_module(x, scale)
    out = jax.block_until_ready(out)

    # Reference check against plain JAX division.
    ref = x / scale
    assert out.shape == x.shape and out.dtype == x.dtype
    assert jnp.allclose(out, ref, rtol=1e-6, atol=1e-6)

    print("KERNEL_OK")
</pallas_src>

<mosaic_0001>
module attributes {stable_mosaic.version = 11 : i64} {
  func.func @_div_kernel(%arg0: i32, %arg1: memref<1x1xf32, #tpu.memory_space<smem>>, %arg2: memref<8x256xf32, #tpu.memory_space<vmem>>, %arg3: memref<8x256xf32, #tpu.memory_space<vmem>>) attributes {dimension_semantics = [#tpu.dimension_semantics<parallel>], iteration_bounds = array<i64: 1>, scalar_prefetch = 0 : i64, scratch_operands = 0 : i64, tpu.core_type = #tpu.core_type<tc>, window_params = [{transform_indices = @transform_0, window_bounds = array<i64: 1, 1>}, {transform_indices = @transform_1, window_bounds = array<i64: 8, 256>}, {transform_indices = @transform_2, window_bounds = array<i64: 8, 256>}]} {
    %c0 = arith.constant 0 : index
    %c0_0 = arith.constant 0 : index
    %0 = memref.load %arg1[%c0, %c0_0] : memref<1x1xf32, #tpu.memory_space<smem>>
    %cst = arith.constant 1.000000e+00 : f32
    %1 = arith.divf %cst, %0 : f32
    %c0_1 = arith.constant 0 : index
    %c0_2 = arith.constant 0 : index
    %2 = vector.load %arg2[%c0_1, %c0_2] : memref<8x256xf32, #tpu.memory_space<vmem>>, vector<8x256xf32>
    %3 = vector.broadcast %1 : f32 to vector<8x256xf32>
    %4 = arith.mulf %2, %3 : vector<8x256xf32>
    %c0_3 = arith.constant 0 : index
    %c0_4 = arith.constant 0 : index
    %5 = vector.load %arg3[%c0_3, %c0_4] : memref<8x256xf32, #tpu.memory_space<vmem>>, vector<8x256xf32>
    tpu.vector_store %arg3[%c0_3, %c0_4], %4 {strides = array<i32>} : memref<8x256xf32, #tpu.memory_space<vmem>>, vector<8x256xf32>,
    return
  }
  func.func @transform_0(%arg0: i32) -> (i32, i32) {
    %c0_i32 = arith.constant 0 : i32
    %c0_i32_0 = arith.constant 0 : i32
    %c0_i32_1 = arith.constant 0 : i32
    return %c0_i32, %c0_i32_0 : i32, i32
  }
  func.func @transform_1(%arg0: i32) -> (i32, i32) {
    %c0_i32 = arith.constant 0 : i32
    %c0_i32_0 = arith.constant 0 : i32
    return %arg0, %c0_i32 : i32, i32
  }
  func.func @transform_2(%arg0: i32) -> (i32, i32) {
    %c0_i32 = arith.constant 0 : i32
    %c0_i32_0 = arith.constant 0 : i32
    return %arg0, %c0_i32 : i32, i32
  }
}

</mosaic_0001>

<llo_original>
// kernel: tpu_custom_call.1
$region0: #{tpu_custom_call.1}
  #allocation0 [shape = 'u32[]', space=smem, size = 0x4, offset = 0x4, fixed_abs, tag = 'smem constant byte address 0x4 - core index']
  #allocation1 [shape = 'u32[144,128]{1,0:T(1,128)}', space=vmem, size = 0x12000, scoped, tag = 'internal scratch']
  #allocation2 [shape = 'f32[1,1]{1,0:T(1,128)S(6)}', space=smem, size = 0x200, scoped, tag = 'scoped memory for tpu_custom_call.1']
  %s0 = inlined_call_operand.<no memory space> [shape: f32[1,1], index: 0, kind: input, shape index: {}]
  %s1 = inlined_call_operand.hbm [shape: f32[8,256], index: 1, kind: input, shape index: {}]
  %s2 = inlined_call_operand.hbm [shape: f32[8,256], index: 2, kind: output, shape index: {}]
  %s3 = sld [smem:[#allocation0]]
  $region22: #{tpu_custom_call.1} parent=0
    _
  %s5 = ssub.s32 1, %s3
  %s6 = scalar_select 0, %s5, %s3
  %7 = sst [smem:[#allocation2]] %s0
  $region1: #{tpu_custom_call.1} parent=0
    #allocation3 [shape = 'u8[8192]{0}', space=vmem, size = 0x2000, scoped, tag = 'input window, operand 1, single buffered']
    #allocation4 [shape = 's32[1]{0}', space=sflag, size = 0x4, scoped, tag = 'scoped memory for tpu_custom_call.1']
    #allocation5 [shape = 's32[1]{0}', space=sflag, size = 0x4, scoped, tag = 'scoped memory for tpu_custom_call.1']
    #allocation6 [shape = 'u8[8192]{0}', space=vmem, size = 0x2000, scoped, tag = 'output window, operand 0, single buffered']
    %8 = vsyncpa [#allocation4], 0
    %9 = vsyncpa [#allocation5], 0
    // Predicated region
    $region2: #{tpu_custom_call.1} parent=1 // pred_check
      _
    $region3: #{tpu_custom_call.1} parent=1 // pred_check_branch
      %11 = sbr.rel (0) target = $region5
    $region4: #{tpu_custom_call.1} parent=1 // pred_region
      _
    $region5: #{tpu_custom_call.1} parent=1 // pred_fallthru
      _
    // Predicated region
    $region6: #{tpu_custom_call.1} parent=1 // pred_check
      _
    $region7: #{tpu_custom_call.1} parent=1 // pred_check_branch
      %13 = sbr.rel (0) target = $region9
    $region8: #{tpu_custom_call.1} parent=1 // pred_region
      %s15 = ssub.s32 256, 256
      %16 = vsyncadd [#allocation4], %s15
      %s18 = sshll.u32 [#allocation3], 4
      %s19 = int_to_ptr.vmem [resolvable:$true] %s18
      %21 = dma.hbm_to_vmem [thread:$0]  %s1, 256, %s19, [#allocation4]
    $region9: #{tpu_custom_call.1} parent=1 // pred_fallthru
      _
    // Predicated region
    $region10: #{tpu_custom_call.1} parent=1 // pred_check
      _
    $region11: #{tpu_custom_call.1} parent=1 // pred_check_branch
      %23 = sbr.rel (0) target = $region13
    $region12: #{tpu_custom_call.1} parent=1 // pred_region
      %24 = dma.done [#allocation4], 256
    $region13: #{tpu_custom_call.1} parent=1 // pred_fallthru
      _
    %s25 = sld [smem:[#allocation2]]
    %v26 = vstv %s25
    %v27 = vrcp.pop %v26
    %s28 = vtos %v27
    %v29 = vld [vmem:[#allocation3] sm:$0xff]
    %v30 = vld [vmem:[#allocation3 + $0x8] sm:$0xff]
    %v31 = vstv %s28
    %v32 = vmul.f32 %v29, %v31
    %v33 = vmul.f32 %v30, %v31
    %34 = vst [vmem:[#allocation6] sm:$0xff] %v32
    %35 = vst [vmem:[#allocation6 + $0x8] sm:$0xff] %v33
    // Predicated region
    $region14: #{tpu_custom_call.1} parent=1 // pred_check
      _
    $region15: #{tpu_custom_call.1} parent=1 // pred_check_branch
      %37 = sbr.rel (0) target = $region17
    $region16: #{tpu_custom_call.1} parent=1 // pred_region
      %s39 = ssub.s32 256, 256
      %40 = vsyncadd [#allocation5], %s39
      %s42 = sshll.u32 [#allocation6], 4
      %s43 = int_to_ptr.vmem [resolvable:$true] %s42
      %45 = dma.vmem_to_hbm [thread:$0]  %s43, 256, %s2, [#allocation5]
    $region17: #{tpu_custom_call.1} parent=1 // pred_fallthru
      _
    // Predicated region
    $region18: #{tpu_custom_call.1} parent=1 // pred_check
      _
    $region19: #{tpu_custom_call.1} parent=1 // pred_check_branch
      %47 = sbr.rel (0) target = $region21
    $region20: #{tpu_custom_call.1} parent=1 // pred_region
      %48 = dma.done [#allocation5], 256
    $region21: #{tpu_custom_call.1} parent=1 // pred_fallthru
      _
    %49 = vsyncpa [#allocation4], 1
    %50 = vsyncpa [#allocation5], 1

</llo_original>
